<compile_context>
chip_gen: v5e
topology: v5e:2x2
jax: 0.10.0
libtpu: 0.0.40
codegen_flags: <defaults>
</compile_context>

<pallas_src>
import functools

import jax
import jax.numpy as jnp
from jax.experimental import pallas as pl
from jax.experimental.pallas import tpu as pltpu

NUM_HIDDEN_LAYERS = 3
LANE = 128
SUBLANE_UNIT = 16  # bf16-friendly sublane multiple for batch tiles


def _round_up(x, m):
    return ((x + m - 1) // m) * m


# ---------------------------------------------------------------------------
# Kernel
# ---------------------------------------------------------------------------
def _actor_kernel(state_ref,            # [bt, obs]           f32
                  w_all_ref,            # [obs, 4*H_P]        bf16 (in | s0 | s1 | s2)
                  b_in_ref,             # [1, H_P]            f32
                  w_hx_ref,             # [3, H_P, H_P]       bf16
                  b_h_ref,              # [3, 1, H_P]         f32
                  w_out_ref,            # [H_P, OUT_P]        bf16
                  b_out_ref,            # [1, OUT_P]          f32
                  out_ref,              # [bt, OUT_P]         f32
                  *, act_size):
    h_p = w_hx_ref.shape[-1]
    inp = state_ref[...].astype(jnp.bfloat16)

    # One wide fused matmul: linear_in and all three dense-skip projections.
    proj = jnp.dot(inp, w_all_ref[...], preferred_element_type=jnp.float32)

    # x = relu(linear_in(state))
    x = jnp.maximum(proj[:, :h_p] + b_in_ref[...], 0.0)

    for i in range(NUM_HIDDEN_LAYERS):
        # relu(cat([x, state]) @ W_h + b) == relu(x @ W_x + state @ W_s + b)
        y = jnp.dot(x.astype(jnp.bfloat16), w_hx_ref[i],
                    preferred_element_type=jnp.float32)
        y = y + proj[:, (i + 1) * h_p:(i + 2) * h_p] + b_h_ref[i]
        x = jnp.maximum(y, 0.0)

    out = jnp.dot(x.astype(jnp.bfloat16), w_out_ref[...],
                  preferred_element_type=jnp.float32)
    out = out + b_out_ref[...]

    # Fused log_std clamp: lanes [act_size, 2*act_size) clipped to [-20, 2].
    lane = jax.lax.broadcasted_iota(jnp.int32, out.shape, dimension=1)
    is_log_std = (lane >= act_size) & (lane < 2 * act_size)
    out_ref[...] = jnp.where(is_log_std,
                             jnp.clip(out, -20.0, 2.0),
                             out).astype(out_ref.dtype)


# ---------------------------------------------------------------------------
# One-time param prep: split hidden weights, fuse linear_in + skips, pad to
# 128 lanes, cast matmul weights to bf16.  Returns ONLY arrays (jit-safe).
# ---------------------------------------------------------------------------
def prepare_kernel_params(params):
    obs = params["w_in"].shape[0]
    hidden = params["w_in"].shape[1]
    out_dim = params["w_out"].shape[1]

    h_p = _round_up(hidden, LANE)
    out_p = _round_up(out_dim, LANE)

    def pad2(w, rows, cols):
        return jnp.pad(w, ((0, rows - w.shape[0]), (0, cols - w.shape[1])))

    w_x_list, w_s_list, b_h_list = [], [], []
    for name in ("h0", "h1", "h2"):
        w = params[f"w_{name}"]                       # [hidden + obs, hidden]
        w_x_list.append(pad2(w[:hidden, :], h_p, h_p))
        w_s_list.append(pad2(w[hidden:, :], obs, h_p))
        b_h_list.append(pad2(params[f"b_{name}"], 1, h_p))

    w_in_p = pad2(params["w_in"], obs, h_p)
    w_all = jnp.concatenate([w_in_p] + w_s_list, axis=1)    # [obs, 4*h_p]

    bf16 = jnp.bfloat16
    return dict(
        w_all=w_all.astype(bf16),
        b_in=pad2(params["b_in"], 1, h_p),
        w_hx=jnp.stack(w_x_list).astype(bf16),               # [3, h_p, h_p]
        b_h=jnp.stack(b_h_list),                              # [3, 1, h_p]
        w_out=pad2(params["w_out"], h_p, out_p).astype(bf16),
        b_out=pad2(params["b_out"], 1, out_p),
    )


# ---------------------------------------------------------------------------
# Wrapper
# ---------------------------------------------------------------------------
@functools.partial(jax.jit, static_argnames=("act_size", "batch_tile"))
def actor_forward(state, kparams, *, act_size, batch_tile=1024):
    """state: [B, obs] f32.  kparams: output of prepare_kernel_params."""
    B, obs = state.shape
    obs_w = kparams["w_all"].shape[0]
    assert obs == obs_w, f"state obs dim {obs} != weight obs dim {obs_w}"
    h_p = kparams["w_out"].shape[0]
    out_p = kparams["w_out"].shape[1]

    batch_tile = _round_up(batch_tile, SUBLANE_UNIT)
    b_r = _round_up(B, SUBLANE_UNIT)
    if b_r <= 2 * SUBLANE_UNIT:
        bt = b_r                                  # tiny batch: single tile
    else:
        # At least two tiles when there's enough work (v7x dual TensorCore).
        bt = min(batch_tile, _round_up((b_r + 1) // 2, SUBLANE_UNIT))
    b_pad = _round_up(B, bt)
    if b_pad != B:                                # single pad op, batch axis only
        state = jnp.pad(state, ((0, b_pad - B), (0, 0)))

    rep2 = lambda i: (0, 0)
    rep3 = lambda i: (0, 0, 0)

    out = pl.pallas_call(
        functools.partial(_actor_kernel, act_size=act_size),
        out_shape=jax.ShapeDtypeStruct((b_pad, out_p), jnp.float32),
        grid_spec=pltpu.PrefetchScalarGridSpec(
            num_scalar_prefetch=0,
            grid=(b_pad // bt,),
            in_specs=[
                pl.BlockSpec((bt, obs), lambda i: (i, 0)),                      # state
                pl.BlockSpec((obs, (NUM_HIDDEN_LAYERS + 1) * h_p), rep2),       # w_all
                pl.BlockSpec((1, h_p), rep2),                                   # b_in
                pl.BlockSpec((NUM_HIDDEN_LAYERS, h_p, h_p), rep3),              # w_hx
                pl.BlockSpec((NUM_HIDDEN_LAYERS, 1, h_p), rep3),                # b_h
                pl.BlockSpec((h_p, out_p), rep2),                               # w_out
                pl.BlockSpec((1, out_p), rep2),                                 # b_out
            ],
            out_specs=pl.BlockSpec((bt, out_p), lambda i: (i, 0)),
        ),
        compiler_params=pltpu.CompilerParams(
            dimension_semantics=("parallel",)),
    )(state,
      kparams["w_all"], kparams["b_in"],
      kparams["w_hx"], kparams["b_h"],
      kparams["w_out"], kparams["b_out"])

    out = out[:B]
    mean = out[:, :act_size]
    log_std = out[:, act_size:2 * act_size]       # already clamped in kernel
    return mean, log_std


# ---------------------------------------------------------------------------
# Init + pure-JAX reference (same math as the PyTorch Actor.forward)
# ---------------------------------------------------------------------------
def init_actor_params(key, obs_size, act_size, hidden_size):
    """PyTorch-Linear-style init. Weights stored transposed [in, out]; biases [1, out]."""
    hidden_aug = hidden_size + obs_size
    layer_dims = [(obs_size, hidden_size)]
    layer_dims += [(hidden_aug, hidden_size)] * NUM_HIDDEN_LAYERS
    layer_dims += [(hidden_size, act_size * 2)]

    names = ["in", "h0", "h1", "h2", "out"]
    params = {}
    keys = jax.random.split(key, 2 * len(layer_dims))
    for i, ((fan_in, fan_out), name) in enumerate(zip(layer_dims, names)):
        bound = 1.0 / jnp.sqrt(jnp.float32(fan_in))
        params[f"w_{name}"] = jax.random.uniform(
            keys[2 * i], (fan_in, fan_out), minval=-bound, maxval=bound,
            dtype=jnp.float32)
        params[f"b_{name}"] = jax.random.uniform(
            keys[2 * i + 1], (1, fan_out), minval=-bound, maxval=bound,
            dtype=jnp.float32)
    return params


def actor_forward_ref(state, params):
    x = jnp.maximum(state @ params["w_in"] + params["b_in"], 0.0)
    for name in ("h0", "h1", "h2"):
        xa = jnp.concatenate([x, state], axis=1)
        x = jnp.maximum(xa @ params[f"w_{name}"] + params[f"b_{name}"], 0.0)
    out = x @ params["w_out"] + params["b_out"]
    act = params["w_out"].shape[1] // 2
    return out[:, :act], jnp.clip(out[:, act:], -20.0, 2.0)


if __name__ == "__main__":
    obs_size, act_size, hidden_size, batch = 16, 4, 32, 8

    key = jax.random.PRNGKey(0)
    pkey, skey = jax.random.split(key)
    params = init_actor_params(pkey, obs_size, act_size, hidden_size)
    state = jax.random.normal(skey, (batch, obs_size), dtype=jnp.float32)

    kparams = prepare_kernel_params(params)

    mean, log_std = actor_forward(state, kparams, act_size=act_size)
    jax.block_until_ready((mean, log_std))

    mean_ref, log_std_ref = actor_forward_ref(state, params)
    assert mean.shape == (batch, act_size) and log_std.shape == (batch, act_size)
    # bf16 matmul inputs with f32 accumulation -> loosened tolerance vs f32 ref.
    assert jnp.allclose(mean, mean_ref, atol=2e-2, rtol=2e-2)
    assert jnp.allclose(log_std, log_std_ref, atol=2e-2, rtol=2e-2)

    print("KERNEL_OK")
</pallas_src>

<mosaic_0001>
module attributes {stable_mosaic.version = 11 : i64} {
  func.func @_actor_kernel(%arg0: i32, %arg1: memref<16x16xf32, #tpu.memory_space<vmem>>, %arg2: memref<16x512xbf16, #tpu.memory_space<vmem>>, %arg3: memref<1x128xf32, #tpu.memory_space<vmem>>, %arg4: memref<3x128x128xbf16, #tpu.memory_space<vmem>>, %arg5: memref<3x1x128xf32, #tpu.memory_space<vmem>>, %arg6: memref<128x128xbf16, #tpu.memory_space<vmem>>, %arg7: memref<1x128xf32, #tpu.memory_space<vmem>>, %arg8: memref<16x128xf32, #tpu.memory_space<vmem>>) attributes {dimension_semantics = [#tpu.dimension_semantics<parallel>], iteration_bounds = array<i64: 1>, scalar_prefetch = 0 : i64, scratch_operands = 0 : i64, tpu.core_type = #tpu.core_type<tc>, window_params = [{transform_indices = @transform_0, window_bounds = array<i64: 16, 16>}, {pipeline_mode = #tpu.pipeline_mode<synchronous>, transform_indices = @transform_1, window_bounds = array<i64: 16, 512>}, {pipeline_mode = #tpu.pipeline_mode<synchronous>, transform_indices = @transform_2, window_bounds = array<i64: 1, 128>}, {pipeline_mode = #tpu.pipeline_mode<synchronous>, transform_indices = @transform_3, window_bounds = array<i64: 3, 128, 128>}, {pipeline_mode = #tpu.pipeline_mode<synchronous>, transform_indices = @transform_4, window_bounds = array<i64: 3, 1, 128>}, {pipeline_mode = #tpu.pipeline_mode<synchronous>, transform_indices = @transform_5, window_bounds = array<i64: 128, 128>}, {pipeline_mode = #tpu.pipeline_mode<synchronous>, transform_indices = @transform_6, window_bounds = array<i64: 1, 128>}, {transform_indices = @transform_7, window_bounds = array<i64: 16, 128>}]} {
    %c0 = arith.constant 0 : index
    %c0_0 = arith.constant 0 : index
    %0 = vector.load %arg1[%c0, %c0_0] : memref<16x16xf32, #tpu.memory_space<vmem>>, vector<16x16xf32>
    %1 = arith.truncf %0 : vector<16x16xf32> to vector<16x16xbf16>
    %c0_1 = arith.constant 0 : index
    %c0_2 = arith.constant 0 : index
    %2 = vector.load %arg2[%c0_1, %c0_2] : memref<16x512xbf16, #tpu.memory_space<vmem>>, vector<16x512xbf16>
    %cst = arith.constant dense<0.000000e+00> : vector<16x512xf32>
    %3 = tpu.matmul %1, %2, %cst {dimension_numbers = #tpu.dot_dimension_numbers<[1], [0], [0], [1], [0, 0, 1, 1], [], []>} : vector<16x16xbf16>, vector<16x512xbf16>, vector<16x512xf32> -> vector<16x512xf32>
    %4 = vector.extract_strided_slice %3 {offsets = [0, 0], sizes = [16, 128], strides = [1, 1]} : vector<16x512xf32> to vector<16x128xf32>
    %c0_3 = arith.constant 0 : index
    %c0_4 = arith.constant 0 : index
    %5 = vector.load %arg3[%c0_3, %c0_4] : memref<1x128xf32, #tpu.memory_space<vmem>>, vector<1x128xf32>
    %6 = vector.broadcast %5 : vector<1x128xf32> to vector<16x128xf32>
    %7 = arith.addf %4, %6 : vector<16x128xf32>
    %cst_5 = arith.constant 0.000000e+00 : f32
    %8 = vector.broadcast %cst_5 : f32 to vector<16x128xf32>
    %9 = arith.maximumf %7, %8 : vector<16x128xf32>
    %10 = arith.truncf %9 : vector<16x128xf32> to vector<16x128xbf16>
    %c0_6 = arith.constant 0 : index
    %c0_7 = arith.constant 0 : index
    %c0_8 = arith.constant 0 : index
    %11 = vector.load %arg4[%c0_6, %c0_7, %c0_8] : memref<3x128x128xbf16, #tpu.memory_space<vmem>>, vector<1x128x128xbf16>
    %12 = vector.shape_cast %11 : vector<1x128x128xbf16> to vector<128x128xbf16>
    %cst_9 = arith.constant dense<0.000000e+00> : vector<16x128xf32>
    %13 = tpu.matmul %10, %12, %cst_9 {dimension_numbers = #tpu.dot_dimension_numbers<[1], [0], [0], [1], [0, 0, 1, 1], [], []>} : vector<16x128xbf16>, vector<128x128xbf16>, vector<16x128xf32> -> vector<16x128xf32>
    %14 = vector.extract_strided_slice %3 {offsets = [0, 128], sizes = [16, 128], strides = [1, 1]} : vector<16x512xf32> to vector<16x128xf32>
    %15 = arith.addf %13, %14 : vector<16x128xf32>
    %c0_10 = arith.constant 0 : index
    %c0_11 = arith.constant 0 : index
    %c0_12 = arith.constant 0 : index
    %16 = vector.load %arg5[%c0_10, %c0_11, %c0_12] : memref<3x1x128xf32, #tpu.memory_space<vmem>>, vector<1x1x128xf32>
    %17 = vector.shape_cast %16 : vector<1x1x128xf32> to vector<1x128xf32>
    %18 = vector.broadcast %17 : vector<1x128xf32> to vector<16x128xf32>
    %19 = arith.addf %15, %18 : vector<16x128xf32>
    %cst_13 = arith.constant 0.000000e+00 : f32
    %20 = vector.broadcast %cst_13 : f32 to vector<16x128xf32>
    %21 = arith.maximumf %19, %20 : vector<16x128xf32>
    %22 = arith.truncf %21 : vector<16x128xf32> to vector<16x128xbf16>
    %c1 = arith.constant 1 : index
    %c0_14 = arith.constant 0 : index
    %c0_15 = arith.constant 0 : index
    %23 = vector.load %arg4[%c1, %c0_14, %c0_15] : memref<3x128x128xbf16, #tpu.memory_space<vmem>>, vector<1x128x128xbf16>
    %24 = vector.shape_cast %23 : vector<1x128x128xbf16> to vector<128x128xbf16>
    %cst_16 = arith.constant dense<0.000000e+00> : vector<16x128xf32>
    %25 = tpu.matmul %22, %24, %cst_16 {dimension_numbers = #tpu.dot_dimension_numbers<[1], [0], [0], [1], [0, 0, 1, 1], [], []>} : vector<16x128xbf16>, vector<128x128xbf16>, vector<16x128xf32> -> vector<16x128xf32>
    %26 = vector.extract_strided_slice %3 {offsets = [0, 256], sizes = [16, 128], strides = [1, 1]} : vector<16x512xf32> to vector<16x128xf32>
    %27 = arith.addf %25, %26 : vector<16x128xf32>
    %c1_17 = arith.constant 1 : index
    %c0_18 = arith.constant 0 : index
    %c0_19 = arith.constant 0 : index
    %28 = vector.load %arg5[%c1_17, %c0_18, %c0_19] : memref<3x1x128xf32, #tpu.memory_space<vmem>>, vector<1x1x128xf32>
    %29 = vector.shape_cast %28 : vector<1x1x128xf32> to vector<1x128xf32>
    %30 = vector.broadcast %29 : vector<1x128xf32> to vector<16x128xf32>
    %31 = arith.addf %27, %30 : vector<16x128xf32>
    %cst_20 = arith.constant 0.000000e+00 : f32
    %32 = vector.broadcast %cst_20 : f32 to vector<16x128xf32>
    %33 = arith.maximumf %31, %32 : vector<16x128xf32>
    %34 = arith.truncf %33 : vector<16x128xf32> to vector<16x128xbf16>
    %c2 = arith.constant 2 : index
    %c0_21 = arith.constant 0 : index
    %c0_22 = arith.constant 0 : index
    %35 = vector.load %arg4[%c2, %c0_21, %c0_22] : memref<3x128x128xbf16, #tpu.memory_space<vmem>>, vector<1x128x128xbf16>
    %36 = vector.shape_cast %35 : vector<1x128x128xbf16> to vector<128x128xbf16>
    %cst_23 = arith.constant dense<0.000000e+00> : vector<16x128xf32>
    %37 = tpu.matmul %34, %36, %cst_23 {dimension_numbers = #tpu.dot_dimension_numbers<[1], [0], [0], [1], [0, 0, 1, 1], [], []>} : vector<16x128xbf16>, vector<128x128xbf16>, vector<16x128xf32> -> vector<16x128xf32>
    %38 = vector.extract_strided_slice %3 {offsets = [0, 384], sizes = [16, 128], strides = [1, 1]} : vector<16x512xf32> to vector<16x128xf32>
    %39 = arith.addf %37, %38 : vector<16x128xf32>
    %c2_24 = arith.constant 2 : index
    %c0_25 = arith.constant 0 : index
    %c0_26 = arith.constant 0 : index
    %40 = vector.load %arg5[%c2_24, %c0_25, %c0_26] : memref<3x1x128xf32, #tpu.memory_space<vmem>>, vector<1x1x128xf32>
    %41 = vector.shape_cast %40 : vector<1x1x128xf32> to vector<1x128xf32>
    %42 = vector.broadcast %41 : vector<1x128xf32> to vector<16x128xf32>
    %43 = arith.addf %39, %42 : vector<16x128xf32>
    %cst_27 = arith.constant 0.000000e+00 : f32
    %44 = vector.broadcast %cst_27 : f32 to vector<16x128xf32>
    %45 = arith.maximumf %43, %44 : vector<16x128xf32>
    %46 = arith.truncf %45 : vector<16x128xf32> to vector<16x128xbf16>
    %c0_28 = arith.constant 0 : index
    %c0_29 = arith.constant 0 : index
    %47 = vector.load %arg6[%c0_28, %c0_29] : memref<128x128xbf16, #tpu.memory_space<vmem>>, vector<128x128xbf16>
    %cst_30 = arith.constant dense<0.000000e+00> : vector<16x128xf32>
    %48 = tpu.matmul %46, %47, %cst_30 {dimension_numbers = #tpu.dot_dimension_numbers<[1], [0], [0], [1], [0, 0, 1, 1], [], []>} : vector<16x128xbf16>, vector<128x128xbf16>, vector<16x128xf32> -> vector<16x128xf32>
    %c0_31 = arith.constant 0 : index
    %c0_32 = arith.constant 0 : index
    %49 = vector.load %arg7[%c0_31, %c0_32] : memref<1x128xf32, #tpu.memory_space<vmem>>, vector<1x128xf32>
    %50 = vector.broadcast %49 : vector<1x128xf32> to vector<16x128xf32>
    %51 = arith.addf %48, %50 : vector<16x128xf32>
    %52 = tpu.iota {dimensions = array<i32: 1>} : vector<16x128xi32>
    %c4_i32 = arith.constant 4 : i32
    %53 = vector.broadcast %c4_i32 : i32 to vector<16x128xi32>
    %54 = arith.cmpi sge, %52, %53 : vector<16x128xi32>
    %c8_i32 = arith.constant 8 : i32
    %55 = vector.broadcast %c8_i32 : i32 to vector<16x128xi32>
    %56 = arith.cmpi slt, %52, %55 : vector<16x128xi32>
    %57 = arith.andi %54, %56 : vector<16x128xi1>
    %cst_33 = arith.constant -2.000000e+01 : f32
    %cst_34 = arith.constant 2.000000e+00 : f32
    %58 = vector.broadcast %cst_33 : f32 to vector<16x128xf32>
    %59 = arith.maximumf %58, %51 : vector<16x128xf32>
    %60 = vector.broadcast %cst_34 : f32 to vector<16x128xf32>
    %61 = arith.minimumf %60, %59 : vector<16x128xf32>
    %62 = arith.select %57, %61, %51 : vector<16x128xi1>, vector<16x128xf32>
    %c0_35 = arith.constant 0 : index
    %c0_36 = arith.constant 0 : index
    %63 = vector.load %arg8[%c0_35, %c0_36] : memref<16x128xf32, #tpu.memory_space<vmem>>, vector<16x128xf32>
    tpu.vector_store %arg8[%c0_35, %c0_36], %62 {strides = array<i32>} : memref<16x128xf32, #tpu.memory_space<vmem>>, vector<16x128xf32>,
    return
  }
  func.func @transform_0(%arg0: i32) -> (i32, i32) {
    %c0_i32 = arith.constant 0 : i32
    %c0_i32_0 = arith.constant 0 : i32
    return %arg0, %c0_i32 : i32, i32
  }
  func.func @transform_1(%arg0: i32) -> (i32, i32) {
    %c0_i32 = arith.constant 0 : i32
    %c0_i32_0 = arith.constant 0 : i32
    %c0_i32_1 = arith.constant 0 : i32
    return %c0_i32, %c0_i32_0 : i32, i32
  }
  func.func @transform_2(%arg0: i32) -> (i32, i32) {
    %c0_i32 = arith.constant 0 : i32
    %c0_i32_0 = arith.constant 0 : i32
    %c0_i32_1 = arith.constant 0 : i32
    return %c0_i32, %c0_i32_0 : i32, i32
  }
  func.func @transform_3(%arg0: i32) -> (i32, i32, i32) {
    %c0_i32 = arith.constant 0 : i32
    %c0_i32_0 = arith.constant 0 : i32
    %c0_i32_1 = arith.constant 0 : i32
    %c0_i32_2 = arith.constant 0 : i32
    return %c0_i32, %c0_i32_0, %c0_i32_1 : i32, i32, i32
  }
  func.func @transform_4(%arg0: i32) -> (i32, i32, i32) {
    %c0_i32 = arith.constant 0 : i32
    %c0_i32_0 = arith.constant 0 : i32
    %c0_i32_1 = arith.constant 0 : i32
    %c0_i32_2 = arith.constant 0 : i32
    return %c0_i32, %c0_i32_0, %c0_i32_1 : i32, i32, i32
  }
  func.func @transform_5(%arg0: i32) -> (i32, i32) {
    %c0_i32 = arith.constant 0 : i32
    %c0_i32_0 = arith.constant 0 : i32
    %c0_i32_1 = arith.constant 0 : i32
    return %c0_i32, %c0_i32_0 : i32, i32
  }
  func.func @transform_6(%arg0: i32) -> (i32, i32) {
    %c0_i32 = arith.constant 0 : i32
    %c0_i32_0 = arith.constant 0 : i32
    %c0_i32_1 = arith.constant 0 : i32
    return %c0_i32, %c0_i32_0 : i32, i32
  }
  func.func @transform_7(%arg0: i32) -> (i32, i32) {
    %c0_i32 = arith.constant 0 : i32
    %c0_i32_0 = arith.constant 0 : i32
    return %arg0, %c0_i32 : i32, i32
  }
}

</mosaic_0001>

<llo_original>
// kernel: actor_forward.1
$region0: #{actor_forward.1}
  #allocation0 [shape = 'u32[]', space=smem, size = 0x4, offset = 0x4, fixed_abs, tag = 'smem constant byte address 0x4 - core index']
  #allocation1 [shape = 'u32[72,128]{1,0:T(1,128)}', space=vmem, size = 0x9000, scoped, tag = 'internal scratch']
  %s0 = inlined_call_operand.vmem [shape: f32[16,16], index: 0, kind: input, shape index: {}]
  %s1 = inlined_call_operand.hbm [shape: bf16[16,512], index: 1, kind: input, shape index: {}]
  %s2 = inlined_call_operand.vmem [shape: f32[1,128], index: 2, kind: input, shape index: {}]
  %s3 = inlined_call_operand.hbm [shape: bf16[3,128,128], index: 3, kind: input, shape index: {}]
  %s4 = inlined_call_operand.vmem [shape: f32[3,1,128], index: 4, kind: input, shape index: {}]
  %s5 = inlined_call_operand.hbm [shape: bf16[128,128], index: 5, kind: input, shape index: {}]
  %s6 = inlined_call_operand.vmem [shape: f32[1,128], index: 6, kind: input, shape index: {}]
  %s7 = inlined_call_operand.vmem [shape: f32[16,128], index: 7, kind: output, shape index: {}]
  %s8 = sld [smem:[#allocation0]]
  $region50: #{actor_forward.1} parent=0
    _
  %s10 = ssub.s32 1, %s8
  %s11 = scalar_select 0, %s10, %s8
  $region1: #{actor_forward.1} parent=0
    #allocation2 [shape = 'u8[16384]{0}', space=vmem, size = 0x4000, scoped, tag = 'input window, operand 1, single buffered']
    #allocation3 [shape = 's32[1]{0}', space=sflag, size = 0x4, scoped, tag = 'scoped memory for actor_forward.1']
    #allocation4 [shape = 'u8[98304]{0}', space=vmem, size = 0x18000, scoped, tag = 'input window, operand 3, single buffered']
    #allocation5 [shape = 's32[1]{0}', space=sflag, size = 0x4, scoped, tag = 'scoped memory for actor_forward.1']
    #allocation6 [shape = 'u8[32768]{0}', space=vmem, size = 0x8000, scoped, tag = 'input window, operand 5, single buffered']
    %12 = vsyncpa [#allocation3], 0
    %13 = vsyncpa [#allocation5], 0
    // Predicated region
    $region2: #{actor_forward.1} parent=1 // pred_check
      _
    $region3: #{actor_forward.1} parent=1 // pred_check_branch
      %15 = sbr.rel (0) target = $region5
    $region4: #{actor_forward.1} parent=1 // pred_region
      _
    $region5: #{actor_forward.1} parent=1 // pred_fallthru
      _
    // Predicated region
    $region6: #{actor_forward.1} parent=1 // pred_check
      _
    $region7: #{actor_forward.1} parent=1 // pred_check_branch
      %17 = sbr.rel (0) target = $region9
    $region8: #{actor_forward.1} parent=1 // pred_region
      %19 = vsyncadd [#allocation3], 0
      %s20 = sshll.u32 %s1, 4
      %s21 = int_to_ptr.hbm [resolvable:$true] %s20
      %s22 = sshll.u32 [#allocation2], 4
      %s23 = int_to_ptr.vmem [resolvable:$true] %s22
      %28 = dma.hbm_to_vmem [thread:$0]  %s21, 512, %s23, [#allocation3], 256, 256, 16
    $region9: #{actor_forward.1} parent=1 // pred_fallthru
      _
    // Predicated region
    $region10: #{actor_forward.1} parent=1 // pred_check
      _
    $region11: #{actor_forward.1} parent=1 // pred_check_branch
      %30 = sbr.rel (0) target = $region13
    $region12: #{actor_forward.1} parent=1 // pred_region
      _
    $region13: #{actor_forward.1} parent=1 // pred_fallthru
      _
    // Predicated region
    $region14: #{actor_forward.1} parent=1 // pred_check
      _
    $region15: #{actor_forward.1} parent=1 // pred_check_branch
      %32 = sbr.rel (0) target = $region17
    $region16: #{actor_forward.1} parent=1 // pred_region
      %34 = vsyncadd [#allocation5], 0
      %s35 = sshll.u32 %s3, 4
      %s36 = int_to_ptr.hbm [resolvable:$true] %s35
      %s37 = sshll.u32 [#allocation4], 4
      %s38 = int_to_ptr.vmem [resolvable:$true] %s37
      %43 = dma.hbm_to_vmem [thread:$0]  %s36, 3072, %s38, [#allocation5], 64, 64, 4
    $region17: #{actor_forward.1} parent=1 // pred_fallthru
      _
    // Predicated region
    $region18: #{actor_forward.1} parent=1 // pred_check
      _
    $region19: #{actor_forward.1} parent=1 // pred_check_branch
      %45 = sbr.rel (0) target = $region21
    $region20: #{actor_forward.1} parent=1 // pred_region
      _
    $region21: #{actor_forward.1} parent=1 // pred_fallthru
      _
    // Predicated region
    $region22: #{actor_forward.1} parent=1 // pred_check
      _
    $region23: #{actor_forward.1} parent=1 // pred_check_branch
      %47 = sbr.rel (0) target = $region25
    $region24: #{actor_forward.1} parent=1 // pred_region
      %49 = vsyncadd [#allocation5], 0
      %s50 = sshll.u32 %s5, 4
      %s51 = int_to_ptr.hbm [resolvable:$true] %s50
      %s52 = sshll.u32 [#allocation6], 4
      %s53 = int_to_ptr.vmem [resolvable:$true] %s52
      %58 = dma.hbm_to_vmem [thread:$0]  %s51, 1024, %s53, [#allocation5], 64, 64, 4
    $region25: #{actor_forward.1} parent=1 // pred_fallthru
      _
    // Predicated region
    $region26: #{actor_forward.1} parent=1 // pred_check
      _
    $region27: #{actor_forward.1} parent=1 // pred_check_branch
      %60 = sbr.rel (0) target = $region29
    $region28: #{actor_forward.1} parent=1 // pred_region
      _
    $region29: #{actor_forward.1} parent=1 // pred_fallthru
      _
    // Predicated region
    $region30: #{actor_forward.1} parent=1 // pred_check
      _
    $region31: #{actor_forward.1} parent=1 // pred_check_branch
      %62 = sbr.rel (0) target = $region33
    $region32: #{actor_forward.1} parent=1 // pred_region
      %64 = dma.done [#allocation3], 512
    $region33: #{actor_forward.1} parent=1 // pred_fallthru
      _
    // Predicated region
    $region34: #{actor_forward.1} parent=1 // pred_check
      _
    $region35: #{actor_forward.1} parent=1 // pred_check_branch
      %66 = sbr.rel (0) target = $region37
    $region36: #{actor_forward.1} parent=1 // pred_region
      %68 = dma.done [#allocation5], 3072
    $region37: #{actor_forward.1} parent=1 // pred_fallthru
      _
    // Predicated region
    $region38: #{actor_forward.1} parent=1 // pred_check
      _
    $region39: #{actor_forward.1} parent=1 // pred_check_branch
      %70 = sbr.rel (0) target = $region41
    $region40: #{actor_forward.1} parent=1 // pred_region
      %72 = dma.done [#allocation5], 1024
    $region41: #{actor_forward.1} parent=1 // pred_fallthru
      _
    %v74 = vld [vmem:[%s0] sm:$0xff]
    %v75 = vld [vmem:[%s0 + $0x8] sm:$0xff]
    %v76 = vpack.c.bf16 %v75, %v74
    %v77 = vld [vmem:[#allocation2] sm:$0xff]
    %v78 = vld [vmem:[#allocation2 + $0x8] sm:$0xff]
    %v79 = vld [vmem:[#allocation2 + $0x10] sm:$0xff]
    %v80 = vld [vmem:[#allocation2 + $0x18] sm:$0xff]
    %v85 = vunpack.c.l.b16 %v77
    %v86 = vunpack.c.h.b16 %v77
    %v87 = vunpack.c.l.b16 %v78
    %v88 = vunpack.c.h.b16 %v78
    %v89 = vunpack.c.l.b16 %v79
    %v90 = vunpack.c.h.b16 %v79
    %v91 = vunpack.c.l.b16 %v80
    %v92 = vunpack.c.h.b16 %v80
    %v93 = vpack.c.b16 %v89, %v85
    %v94 = vpack.c.b16 %v90, %v86
    %v95 = vpack.c.b16 %v91, %v87
    %v96 = vpack.c.b16 %v92, %v88
    %vm101 = vcmask 130048
    %v103 = vsel %vm101, %v76, 0
    %105 = vmatpush.bf16.msra.mxu0 0
    %106 = vmatpush.bf16.msra.mxu0 0
    %107 = vmatpush.bf16.msra.mxu0 0
    %108 = vmatpush.bf16.msra.mxu0 0
    %109 = vmatpush.bf16.msra.mxu0 0
    %110 = vmatpush.bf16.msra.mxu0 0
    %111 = vmatpush.bf16.msra.mxu0 0
    %112 = vmatpush.bf16.msra.mxu0 %v93
    %113 = vmatmul.bf16.gmra.mxu0 %v103
    %v114 = vpop.f32.mrf.mxu0
    %v115 = vadd.f32 0.0, %v114
    %v116 = vpop.f32.mrf.mxu0
    %v117 = vadd.f32 0.0, %v116
    %118 = vdwg.mxu0
    %119 = vmatpush.bf16.msra.mxu0 0
    %120 = vmatpush.bf16.msra.mxu0 0
    %121 = vmatpush.bf16.msra.mxu0 0
    %122 = vmatpush.bf16.msra.mxu0 0
    %123 = vmatpush.bf16.msra.mxu0 0
    %124 = vmatpush.bf16.msra.mxu0 0
    %125 = vmatpush.bf16.msra.mxu0 0
    %126 = vmatpush.bf16.msra.mxu0 %v94
    %127 = vmatmul.bf16.gmra.mxu0 %v103
    %v128 = vpop.f32.mrf.mxu0
    %v129 = vadd.f32 0.0, %v128
    %v130 = vpop.f32.mrf.mxu0
    %v131 = vadd.f32 0.0, %v130
    %132 = vdwg.mxu0
    %133 = vmatpush.bf16.msra.mxu0 0
    %134 = vmatpush.bf16.msra.mxu0 0
    %135 = vmatpush.bf16.msra.mxu0 0
    %136 = vmatpush.bf16.msra.mxu0 0
    %137 = vmatpush.bf16.msra.mxu0 0
    %138 = vmatpush.bf16.msra.mxu0 0
    %139 = vmatpush.bf16.msra.mxu0 0
    %140 = vmatpush.bf16.msra.mxu0 %v95
    %141 = vmatmul.bf16.gmra.mxu0 %v103
    %v142 = vpop.f32.mrf.mxu0
    %v143 = vadd.f32 0.0, %v142
    %v144 = vpop.f32.mrf.mxu0
    %v145 = vadd.f32 0.0, %v144
    %146 = vdwg.mxu0
    %147 = vmatpush.bf16.msra.mxu0 0
    %148 = vmatpush.bf16.msra.mxu0 0
    %149 = vmatpush.bf16.msra.mxu0 0
    %150 = vmatpush.bf16.msra.mxu0 0
    %151 = vmatpush.bf16.msra.mxu0 0
    %152 = vmatpush.bf16.msra.mxu0 0
    %153 = vmatpush.bf16.msra.mxu0 0
    %154 = vmatpush.bf16.msra.mxu0 %v96
    %155 = vmatmul.bf16.gmra.mxu0 %v103
    %v156 = vpop.f32.mrf.mxu0
    %v157 = vadd.f32 0.0, %v156
    %v158 = vpop.f32.mrf.mxu0
    %v159 = vadd.f32 0.0, %v158
    %160 = vdwg.mxu0
    %v161 = vld [vmem:[%s2] sm:$0x1]
    %v163 = vperm.slane %v161, 0
    %v165 = vadd.f32 %v115, %v163
    %v166 = vadd.f32 %v117, %v163
    %v167 = vmax.f32 %v165, 0.0
    %v168 = vmax.f32 %v166, 0.0
    %v169 = vpack.c.bf16 %v168, %v167
    %v170 = vld [vmem:[#allocation4] sm:$0xf]
    %v171 = vld [vmem:[#allocation4 + $0x4] sm:$0xf]
    %v172 = vld [vmem:[#allocation4 + $0x8] sm:$0xf]
    %v173 = vld [vmem:[#allocation4 + $0xc] sm:$0xf]
    %v174 = vld [vmem:[#allocation4 + $0x10] sm:$0xf]
    %v175 = vld [vmem:[#allocation4 + $0x14] sm:$0xf]
    %v176 = vld [vmem:[#allocation4 + $0x18] sm:$0xf]
    %v177 = vld [vmem:[#allocation4 + $0x1c] sm:$0xf]
    %v178 = vld [vmem:[#allocation4 + $0x20] sm:$0xf]
    %v179 = vld [vmem:[#allocation4 + $0x24] sm:$0xf]
    %v180 = vld [vmem:[#allocation4 + $0x28] sm:$0xf]
    %v181 = vld [vmem:[#allocation4 + $0x2c] sm:$0xf]
    %v182 = vld [vmem:[#allocation4 + $0x30] sm:$0xf]
    %v183 = vld [vmem:[#allocation4 + $0x34] sm:$0xf]
    %v184 = vld [vmem:[#allocation4 + $0x38] sm:$0xf]
    %v185 = vld [vmem:[#allocation4 + $0x3c] sm:$0xf]
    %v202 = vunpack.c.l.b16 %v170
    %v203 = vunpack.c.l.b16 %v171
    %v204 = vunpack.c.l.b16 %v172
    %v205 = vunpack.c.l.b16 %v173
    %v206 = vunpack.c.l.b16 %v174
    %v207 = vunpack.c.l.b16 %v175
    %v208 = vunpack.c.l.b16 %v176
    %v209 = vunpack.c.l.b16 %v177
    %v210 = vunpack.c.l.b16 %v178
    %v211 = vunpack.c.l.b16 %v179
    %v212 = vunpack.c.l.b16 %v180
    %v213 = vunpack.c.l.b16 %v181
    %v214 = vunpack.c.l.b16 %v182
    %v215 = vunpack.c.l.b16 %v183
    %v216 = vunpack.c.l.b16 %v184
    %v217 = vunpack.c.l.b16 %v185
    %v218 = vpack.c.b16 %v203, %v202
    %v219 = vpack.c.b16 %v205, %v204
    %v220 = vpack.c.b16 %v207, %v206
    %v221 = vpack.c.b16 %v209, %v208
    %v222 = vpack.c.b16 %v211, %v210
    %v223 = vpack.c.b16 %v213, %v212
    %v224 = vpack.c.b16 %v215, %v214
    %v225 = vpack.c.b16 %v217, %v216
    %234 = vmatpush.bf16.msra.mxu0 %v225
    %235 = vmatpush.bf16.msra.mxu0 %v224
    %236 = vmatpush.bf16.msra.mxu0 %v223
    %237 = vmatpush.bf16.msra.mxu0 %v222
    %238 = vmatpush.bf16.msra.mxu0 %v221
    %239 = vmatpush.bf16.msra.mxu0 %v220
    %240 = vmatpush.bf16.msra.mxu0 %v219
    %241 = vmatpush.bf16.msra.mxu0 %v218
    %242 = vmatmul.bf16.gmra.mxu0 %v169
    %v243 = vpop.f32.mrf.mxu0
    %v244 = vadd.f32 %v129, %v243
    %v245 = vpop.f32.mrf.mxu0
    %v246 = vadd.f32 %v131, %v245
    %247 = vdwg.mxu0
    %v248 = vld [vmem:[%s4] sm:$0x1]
    %v250 = vperm.slane %v248, 0
    %v252 = vadd.f32 %v244, %v250
    %v253 = vadd.f32 %v246, %v250
    %v254 = vmax.f32 %v252, 0.0
    %v255 = vmax.f32 %v253, 0.0
    %v256 = vpack.c.bf16 %v255, %v254
    %s257 = scalar_lea.vmem [#allocation4], 64
    %v258 = vld [vmem:[%s257] sm:$0xf]
    %v259 = vld [vmem:[%s257 + $0x4] sm:$0xf]
    %v260 = vld [vmem:[%s257 + $0x8] sm:$0xf]
    %v261 = vld [vmem:[%s257 + $0xc] sm:$0xf]
    %v262 = vld [vmem:[%s257 + $0x10] sm:$0xf]
    %v263 = vld [vmem:[%s257 + $0x14] sm:$0xf]
    %v264 = vld [vmem:[%s257 + $0x18] sm:$0xf]
    %v265 = vld [vmem:[%s257 + $0x1c] sm:$0xf]
    %v266 = vld [vmem:[%s257 + $0x20] sm:$0xf]
    %v267 = vld [vmem:[%s257 + $0x24] sm:$0xf]
    %v268 = vld [vmem:[%s257 + $0x28] sm:$0xf]
    %v269 = vld [vmem:[%s257 + $0x2c] sm:$0xf]
    %v270 = vld [vmem:[%s257 + $0x30] sm:$0xf]
    %v271 = vld [vmem:[%s257 + $0x34] sm:$0xf]
    %v272 = vld [vmem:[%s257 + $0x38] sm:$0xf]
    %v273 = vld [vmem:[%s257 + $0x3c] sm:$0xf]
    %v290 = vunpack.c.l.b16 %v258
    %v291 = vunpack.c.l.b16 %v259
    %v292 = vunpack.c.l.b16 %v260
    %v293 = vunpack.c.l.b16 %v261
    %v294 = vunpack.c.l.b16 %v262
    %v295 = vunpack.c.l.b16 %v263
    %v296 = vunpack.c.l.b16 %v264
    %v297 = vunpack.c.l.b16 %v265
    %v298 = vunpack.c.l.b16 %v266
    %v299 = vunpack.c.l.b16 %v267
    %v300 = vunpack.c.l.b16 %v268
    %v301 = vunpack.c.l.b16 %v269
    %v302 = vunpack.c.l.b16 %v270
    %v303 = vunpack.c.l.b16 %v271
    %v304 = vunpack.c.l.b16 %v272
    %v305 = vunpack.c.l.b16 %v273
    %v306 = vpack.c.b16 %v291, %v290
    %v307 = vpack.c.b16 %v293, %v292
    %v308 = vpack.c.b16 %v295, %v294
    %v309 = vpack.c.b16 %v297, %v296
    %v310 = vpack.c.b16 %v299, %v298
    %v311 = vpack.c.b16 %v301, %v300
    %v312 = vpack.c.b16 %v303, %v302
    %v313 = vpack.c.b16 %v305, %v304
    %322 = vmatpush.bf16.msra.mxu0 %v313
    %323 = vmatpush.bf16.msra.mxu0 %v312
    %324 = vmatpush.bf16.msra.mxu0 %v311
    %325 = vmatpush.bf16.msra.mxu0 %v310
    %326 = vmatpush.bf16.msra.mxu0 %v309
    %327 = vmatpush.bf16.msra.mxu0 %v308
    %328 = vmatpush.bf16.msra.mxu0 %v307
    %329 = vmatpush.bf16.msra.mxu0 %v306
    %330 = vmatmul.bf16.gmra.mxu0 %v256
    %v331 = vpop.f32.mrf.mxu0
    %v332 = vadd.f32 %v143, %v331
    %v333 = vpop.f32.mrf.mxu0
    %v334 = vadd.f32 %v145, %v333
    %335 = vdwg.mxu0
    %s336 = scalar_lea.vmem %s4, 1
    %v337 = vld [vmem:[%s336] sm:$0x1]
    %v339 = vperm.slane %v337, 0
    %v341 = vadd.f32 %v332, %v339
    %v342 = vadd.f32 %v334, %v339
    %v343 = vmax.f32 %v341, 0.0
    %v344 = vmax.f32 %v342, 0.0
    %v345 = vpack.c.bf16 %v344, %v343
    %s346 = scalar_lea.vmem [#allocation4], 128
    %v347 = vld [vmem:[%s346] sm:$0xf]
    %v348 = vld [vmem:[%s346 + $0x4] sm:$0xf]
    %v349 = vld [vmem:[%s346 + $0x8] sm:$0xf]
    %v350 = vld [vmem:[%s346 + $0xc] sm:$0xf]
    %v351 = vld [vmem:[%s346 + $0x10] sm:$0xf]
    %v352 = vld [vmem:[%s346 + $0x14] sm:$0xf]
    %v353 = vld [vmem:[%s346 + $0x18] sm:$0xf]
    %v354 = vld [vmem:[%s346 + $0x1c] sm:$0xf]
    %v355 = vld [vmem:[%s346 + $0x20] sm:$0xf]
    %v356 = vld [vmem:[%s346 + $0x24] sm:$0xf]
    %v357 = vld [vmem:[%s346 + $0x28] sm:$0xf]
    %v358 = vld [vmem:[%s346 + $0x2c] sm:$0xf]
    %v359 = vld [vmem:[%s346 + $0x30] sm:$0xf]
    %v360 = vld [vmem:[%s346 + $0x34] sm:$0xf]
    %v361 = vld [vmem:[%s346 + $0x38] sm:$0xf]
    %v362 = vld [vmem:[%s346 + $0x3c] sm:$0xf]
    %v379 = vunpack.c.l.b16 %v347
    %v380 = vunpack.c.l.b16 %v348
    %v381 = vunpack.c.l.b16 %v349
    %v382 = vunpack.c.l.b16 %v350
    %v383 = vunpack.c.l.b16 %v351
    %v384 = vunpack.c.l.b16 %v352
    %v385 = vunpack.c.l.b16 %v353
    %v386 = vunpack.c.l.b16 %v354
    %v387 = vunpack.c.l.b16 %v355
    %v388 = vunpack.c.l.b16 %v356
    %v389 = vunpack.c.l.b16 %v357
    %v390 = vunpack.c.l.b16 %v358
    %v391 = vunpack.c.l.b16 %v359
    %v392 = vunpack.c.l.b16 %v360
    %v393 = vunpack.c.l.b16 %v361
    %v394 = vunpack.c.l.b16 %v362
    %v395 = vpack.c.b16 %v380, %v379
    %v396 = vpack.c.b16 %v382, %v381
    %v397 = vpack.c.b16 %v384, %v383
    %v398 = vpack.c.b16 %v386, %v385
    %v399 = vpack.c.b16 %v388, %v387
    %v400 = vpack.c.b16 %v390, %v389
    %v401 = vpack.c.b16 %v392, %v391
    %v402 = vpack.c.b16 %v394, %v393
    %411 = vmatpush.bf16.msra.mxu0 %v402
    %412 = vmatpush.bf16.msra.mxu0 %v401
    %413 = vmatpush.bf16.msra.mxu0 %v400
    %414 = vmatpush.bf16.msra.mxu0 %v399
    %415 = vmatpush.bf16.msra.mxu0 %v398
    %416 = vmatpush.bf16.msra.mxu0 %v397
    %417 = vmatpush.bf16.msra.mxu0 %v396
    %418 = vmatpush.bf16.msra.mxu0 %v395
    %419 = vmatmul.bf16.gmra.mxu0 %v345
    %v420 = vpop.f32.mrf.mxu0
    %v421 = vadd.f32 %v157, %v420
    %v422 = vpop.f32.mrf.mxu0
    %v423 = vadd.f32 %v159, %v422
    %424 = vdwg.mxu0
    %s425 = scalar_lea.vmem %s4, 2
    %v426 = vld [vmem:[%s425] sm:$0x1]
    %v428 = vperm.slane %v426, 0
    %v430 = vadd.f32 %v421, %v428
    %v431 = vadd.f32 %v423, %v428
    %v432 = vmax.f32 %v430, 0.0
    %v433 = vmax.f32 %v431, 0.0
    %v434 = vpack.c.bf16 %v433, %v432
    %v435 = vld [vmem:[#allocation6] sm:$0xf]
    %v436 = vld [vmem:[#allocation6 + $0x4] sm:$0xf]
    %v437 = vld [vmem:[#allocation6 + $0x8] sm:$0xf]
    %v438 = vld [vmem:[#allocation6 + $0xc] sm:$0xf]
    %v439 = vld [vmem:[#allocation6 + $0x10] sm:$0xf]
    %v440 = vld [vmem:[#allocation6 + $0x14] sm:$0xf]
    %v441 = vld [vmem:[#allocation6 + $0x18] sm:$0xf]
    %v442 = vld [vmem:[#allocation6 + $0x1c] sm:$0xf]
    %v443 = vld [vmem:[#allocation6 + $0x20] sm:$0xf]
    %v444 = vld [vmem:[#allocation6 + $0x24] sm:$0xf]
    %v445 = vld [vmem:[#allocation6 + $0x28] sm:$0xf]
    %v446 = vld [vmem:[#allocation6 + $0x2c] sm:$0xf]
    %v447 = vld [vmem:[#allocation6 + $0x30] sm:$0xf]
    %v448 = vld [vmem:[#allocation6 + $0x34] sm:$0xf]
    %v449 = vld [vmem:[#allocation6 + $0x38] sm:$0xf]
    %v450 = vld [vmem:[#allocation6 + $0x3c] sm:$0xf]
    %v451 = vld [vmem:[%s6] sm:$0x1]
    %v453 = vperm.slane %v451, 0
    %v471 = vunpack.c.l.b16 %v435
    %v472 = vunpack.c.l.b16 %v436
    %v473 = vunpack.c.l.b16 %v437
    %v474 = vunpack.c.l.b16 %v438
    %v475 = vunpack.c.l.b16 %v439
    %v476 = vunpack.c.l.b16 %v440
    %v477 = vunpack.c.l.b16 %v441
    %v478 = vunpack.c.l.b16 %v442
    %v479 = vunpack.c.l.b16 %v443
    %v480 = vunpack.c.l.b16 %v444
    %v481 = vunpack.c.l.b16 %v445
    %v482 = vunpack.c.l.b16 %v446
    %v483 = vunpack.c.l.b16 %v447
    %v484 = vunpack.c.l.b16 %v448
    %v485 = vunpack.c.l.b16 %v449
    %v486 = vunpack.c.l.b16 %v450
    %v487 = vpack.c.b16 %v472, %v471
    %v488 = vpack.c.b16 %v474, %v473
    %v489 = vpack.c.b16 %v476, %v475
    %v490 = vpack.c.b16 %v478, %v477
    %v491 = vpack.c.b16 %v480, %v479
    %v492 = vpack.c.b16 %v482, %v481
    %v493 = vpack.c.b16 %v484, %v483
    %v494 = vpack.c.b16 %v486, %v485
    %503 = vmatpush.bf16.msra.mxu0 %v494
    %504 = vmatpush.bf16.msra.mxu0 %v493
    %505 = vmatpush.bf16.msra.mxu0 %v492
    %506 = vmatpush.bf16.msra.mxu0 %v491
    %507 = vmatpush.bf16.msra.mxu0 %v490
    %508 = vmatpush.bf16.msra.mxu0 %v489
    %509 = vmatpush.bf16.msra.mxu0 %v488
    %510 = vmatpush.bf16.msra.mxu0 %v487
    %511 = vmatmul.bf16.gmra.mxu0 %v434
    %v512 = vpop.f32.mrf.mxu0
    %v513 = vadd.f32 %v453, %v512
    %v514 = vpop.f32.mrf.mxu0
    %v515 = vadd.f32 %v453, %v514
    %516 = vdwg.mxu0
    %v517 = vlaneseq
    %v518 = vand.u32 %v517, 127
    %vm519 = vcmp.ge.s32.totalorder %v518, 4
    %vm520 = vcmp.lt.s32.totalorder %v518, 8
    %vm521 = vmand %vm519, %vm520
    %v522 = vmax.f32 %v513, -20.0
    %v523 = vmax.f32 %v515, -20.0
    %v524 = vmin.f32 %v522, 2.0
    %v525 = vmin.f32 %v523, 2.0
    %v526 = vsel %vm521, %v524, %v513
    %v527 = vsel %vm521, %v525, %v515
    %528 = vst [vmem:[%s7] sm:$0xff] %v526
    %529 = vst [vmem:[%s7 + $0x8] sm:$0xff] %v527
    // Predicated region
    $region42: #{actor_forward.1} parent=1 // pred_check
      _
    $region43: #{actor_forward.1} parent=1 // pred_check_branch
      %531 = sbr.rel (0) target = $region45
    $region44: #{actor_forward.1} parent=1 // pred_region
      _
    $region45: #{actor_forward.1} parent=1 // pred_fallthru
      _
    // Predicated region
    $region46: #{actor_forward.1} parent=1 // pred_check
      _
    $region47: #{actor_forward.1} parent=1 // pred_check_branch
      %533 = sbr.rel (0) target = $region49
    $region48: #{actor_forward.1} parent=1 // pred_region
      _
    $region49: #{actor_forward.1} parent=1 // pred_fallthru
      _
    %534 = vsyncpa [#allocation3], 1
    %535 = vsyncpa [#allocation5], 1

</llo_original>
